<compile_context>
chip_gen: v7x
topology: tpu7x:2x2x1
jax: 0.10.0
libtpu: 0.0.40
codegen_flags: <defaults>
</compile_context>

<pallas_src>
import jax
import jax.numpy as jnp
from jax.experimental import pallas as pl
from jax.experimental.pallas import tpu as pltpu

EPS = 1e-5
NEG_SLOPE = 0.2
LANE = 128


def _round_up(x, m):
    return ((x + m - 1) // m) * m


def _make_kernel(num_vectors):
    def kernel(*refs):
        v_refs = refs[:num_vectors]
        (w1, b1, g1, bt1,
         w2, b2, g2, bt2,
         w3, b3, g3, bt3,
         w4, b4,
         o_ref) = refs[num_vectors:]

        def mxu(h, w):
            # bf16 MXU operands, f32 accumulation (weights are already bf16).
            return jnp.dot(h.astype(jnp.bfloat16), w,
                           preferred_element_type=jnp.float32)

        def leaky(h):
            # mul + max instead of cmp + select: no predicate vreg.
            return jnp.maximum(h, NEG_SLOPE * h)

        def batch_norm(h, g_ref, bt_ref):
            # Training-mode BatchNorm1d: batch mean, biased batch variance.
            mean = jnp.mean(h, axis=0, keepdims=True)
            diff = h - mean
            var = jnp.mean(diff * diff, axis=0, keepdims=True)
            # Fused affine: one (1, ZP) multiply, then a single full-tile FMA.
            scale = jax.lax.rsqrt(var + EPS) * g_ref[...]
            return diff * scale + bt_ref[...]

        # --- Layer 1: concat fused via split-W1 accumulation ---------------
        #   concat(v_0..v_{n-1}) @ W1  ==  sum_k v_k @ W1[k]
        h = mxu(v_refs[0][...], w1[0])
        for k in range(1, num_vectors):
            h = h + mxu(v_refs[k][...], w1[k])
        h = batch_norm(leaky(h + b1[...]), g1, bt1)

        # --- Layers 2-3 ------------------------------------------------------
        h = batch_norm(leaky(mxu(h, w2[...]) + b2[...]), g2, bt2)
        h = batch_norm(leaky(mxu(h, w3[...]) + b3[...]), g3, bt3)

        # --- Layer 4 ----------------------------------------------------------
        h = leaky(mxu(h, w4[...]) + b4[...])

        o_ref[...] = h.astype(o_ref.dtype)

    return kernel


def pack_params(params, z_size, num_vectors):
    """One-time packing: zero-pad feature dims to a lane-dense multiple of 128,
    cast matmul weights to bf16 (halves weight DMA/VMEM), and split W1 into
    per-input-vector blocks so the concat fuses into the kernel."""
    zp = _round_up(z_size, LANE)

    def pad_cols(a):
        return jnp.pad(a, ((0, 0), (0, zp - a.shape[1])))

    packed = {}
    w1 = pad_cols(params["w1"]).astype(jnp.bfloat16)            # (nv*z, zp)
    packed["w1"] = w1.reshape(num_vectors, z_size, zp)          # (nv, z, zp)
    packed["b1"] = pad_cols(params["b1"])
    packed["g1"] = pad_cols(params["g1"])
    packed["bt1"] = pad_cols(params["bt1"])
    for i in (2, 3, 4):
        w = pad_cols(params[f"w{i}"])                           # (z, zp)
        w = jnp.pad(w, ((0, zp - z_size), (0, 0)))              # (zp, zp)
        packed[f"w{i}"] = w.astype(jnp.bfloat16)
        packed[f"b{i}"] = pad_cols(params[f"b{i}"])
        if i < 4:
            packed[f"g{i}"] = pad_cols(params[f"g{i}"])
            packed[f"bt{i}"] = pad_cols(params[f"bt{i}"])
    return packed


def generator_vector_vector(vectors, packed, z_size):
    """vectors: list of (B, z_size) arrays. packed: output of pack_params."""
    num_vectors = len(vectors)
    B = vectors[0].shape[0]
    zp = packed["b1"].shape[1]

    args = list(vectors) + [
        packed["w1"], packed["b1"], packed["g1"], packed["bt1"],
        packed["w2"], packed["b2"], packed["g2"], packed["bt2"],
        packed["w3"], packed["b3"], packed["g3"], packed["bt3"],
        packed["w4"], packed["b4"],
    ]

    vmem = pl.BlockSpec(memory_space=pltpu.MemorySpace.VMEM)
    out_padded = pl.pallas_call(
        _make_kernel(num_vectors),
        out_shape=jax.ShapeDtypeStruct((B, zp), jnp.float32),
        in_specs=[vmem] * len(args),
        out_specs=vmem,
    )(*args)
    # NOTE: single-block kernel (B=8 here). For large B, switch to a
    # batch-tiled grid with "parallel" semantics and a two-pass BatchNorm
    # (per-block sum / sum-of-squares reduction, then an apply pass) to keep
    # full-batch statistics correct.
    return out_padded[:, :z_size]


def init_params(key, z_size, num_vectors):
    """Deterministic parameter init matching the PyTorch module's shapes.

    nn.Linear(in, out) weight is (out, in); we store it transposed (in, out)
    so the kernel computes x @ W + b. Biases / BN params are stored as (1, out)
    rows for a clean lane layout.
    """
    in0 = num_vectors * z_size
    shapes = [(in0, z_size), (z_size, z_size), (z_size, z_size), (z_size, z_size)]
    params = {}
    keys = jax.random.split(key, 16)
    ki = 0
    for i, (fin, fout) in enumerate(shapes, start=1):
        bound = 1.0 / jnp.sqrt(fin)
        params[f"w{i}"] = jax.random.uniform(
            keys[ki], (fin, fout), jnp.float32, -bound, bound); ki += 1
        params[f"b{i}"] = jax.random.uniform(
            keys[ki], (1, fout), jnp.float32, -bound, bound); ki += 1
        if i < 4:  # BatchNorm after the first three Linear+LeakyReLU blocks
            params[f"g{i}"] = 1.0 + 0.1 * jax.random.normal(
                keys[ki], (1, fout), jnp.float32); ki += 1
            params[f"bt{i}"] = 0.1 * jax.random.normal(
                keys[ki], (1, fout), jnp.float32); ki += 1
    return params


def reference_jax(vectors, params, mxu_bf16):
    """Pure-JAX reference. mxu_bf16=True mirrors the kernel's bf16-operand /
    f32-accumulate matmuls; False is the exact f32 (PyTorch) semantics."""
    x = jnp.concatenate(vectors, axis=1)

    def lin(h, w, b):
        if mxu_bf16:
            return jnp.dot(h.astype(jnp.bfloat16), w.astype(jnp.bfloat16),
                           preferred_element_type=jnp.float32) + b
        return h @ w + b

    def lrelu(h):
        return jnp.where(h > 0, h, NEG_SLOPE * h)

    def bn(h, g, bt):
        m = h.mean(axis=0, keepdims=True)
        v = ((h - m) ** 2).mean(axis=0, keepdims=True)
        return (h - m) / jnp.sqrt(v + EPS) * g + bt

    h = bn(lrelu(lin(x, params["w1"], params["b1"])), params["g1"], params["bt1"])
    h = bn(lrelu(lin(h, params["w2"], params["b2"])), params["g2"], params["bt2"])
    h = bn(lrelu(lin(h, params["w3"], params["b3"])), params["g3"], params["bt3"])
    h = lrelu(lin(h, params["w4"], params["b4"]))
    return h


if __name__ == "__main__":
    z_size = 32
    num_vectors = 4
    batch = 8

    key = jax.random.PRNGKey(0)
    pkey, vkey = jax.random.split(key)
    params = init_params(pkey, z_size, num_vectors)
    packed = pack_params(params, z_size, num_vectors)

    vkeys = jax.random.split(vkey, num_vectors)
    vectors = [jax.random.normal(vkeys[i], (batch, z_size), jnp.float32)
               for i in range(num_vectors)]

    out = generator_vector_vector(vectors, packed, z_size)
    out = jax.block_until_ready(out)

    assert out.shape == (batch, z_size), out.shape

    # Tight check against a reference that mirrors the kernel's bf16-MXU math.
    ref_mirror = reference_jax(vectors, params, mxu_bf16=True)
    err_mirror = float(jnp.max(jnp.abs(out - ref_mirror)))
    assert jnp.allclose(out, ref_mirror, atol=2e-3, rtol=2e-3), err_mirror

    # Loose sanity band against exact f32 (PyTorch) semantics: the only
    # deviation is the bf16-operand matmul approximation.
    ref_f32 = reference_jax(vectors, params, mxu_bf16=False)
    err_f32 = float(jnp.max(jnp.abs(out - ref_f32)))
    assert jnp.allclose(out, ref_f32, atol=1e-1, rtol=1e-1), err_f32

    print("KERNEL_OK")
</pallas_src>

<mosaic_0001>
module attributes {stable_mosaic.version = 11 : i64} {
  func.func @kernel(%arg0: memref<8x32xf32, #tpu.memory_space<vmem>>, %arg1: memref<8x32xf32, #tpu.memory_space<vmem>>, %arg2: memref<8x32xf32, #tpu.memory_space<vmem>>, %arg3: memref<8x32xf32, #tpu.memory_space<vmem>>, %arg4: memref<4x32x128xbf16, #tpu.memory_space<vmem>>, %arg5: memref<1x128xf32, #tpu.memory_space<vmem>>, %arg6: memref<1x128xf32, #tpu.memory_space<vmem>>, %arg7: memref<1x128xf32, #tpu.memory_space<vmem>>, %arg8: memref<128x128xbf16, #tpu.memory_space<vmem>>, %arg9: memref<1x128xf32, #tpu.memory_space<vmem>>, %arg10: memref<1x128xf32, #tpu.memory_space<vmem>>, %arg11: memref<1x128xf32, #tpu.memory_space<vmem>>, %arg12: memref<128x128xbf16, #tpu.memory_space<vmem>>, %arg13: memref<1x128xf32, #tpu.memory_space<vmem>>, %arg14: memref<1x128xf32, #tpu.memory_space<vmem>>, %arg15: memref<1x128xf32, #tpu.memory_space<vmem>>, %arg16: memref<128x128xbf16, #tpu.memory_space<vmem>>, %arg17: memref<1x128xf32, #tpu.memory_space<vmem>>, %arg18: memref<8x128xf32, #tpu.memory_space<vmem>>) attributes {dimension_semantics = [], scalar_prefetch = 0 : i64, scratch_operands = 0 : i64, tpu.core_type = #tpu.core_type<tc>} {
    %c0 = arith.constant 0 : index
    %c0_0 = arith.constant 0 : index
    %0 = vector.load %arg0[%c0, %c0_0] : memref<8x32xf32, #tpu.memory_space<vmem>>, vector<8x32xf32>
    %c0_1 = arith.constant 0 : index
    %c0_2 = arith.constant 0 : index
    %c0_3 = arith.constant 0 : index
    %1 = vector.load %arg4[%c0_1, %c0_2, %c0_3] : memref<4x32x128xbf16, #tpu.memory_space<vmem>>, vector<1x32x128xbf16>
    %2 = vector.shape_cast %1 : vector<1x32x128xbf16> to vector<32x128xbf16>
    %3 = arith.truncf %0 : vector<8x32xf32> to vector<8x32xbf16>
    %cst = arith.constant dense<0.000000e+00> : vector<8x128xf32>
    %4 = tpu.matmul %3, %2, %cst {dimension_numbers = #tpu.dot_dimension_numbers<[1], [0], [0], [1], [0, 0, 1, 1], [], []>} : vector<8x32xbf16>, vector<32x128xbf16>, vector<8x128xf32> -> vector<8x128xf32>
    %c0_4 = arith.constant 0 : index
    %c0_5 = arith.constant 0 : index
    %5 = vector.load %arg1[%c0_4, %c0_5] : memref<8x32xf32, #tpu.memory_space<vmem>>, vector<8x32xf32>
    %c1 = arith.constant 1 : index
    %c0_6 = arith.constant 0 : index
    %c0_7 = arith.constant 0 : index
    %6 = vector.load %arg4[%c1, %c0_6, %c0_7] : memref<4x32x128xbf16, #tpu.memory_space<vmem>>, vector<1x32x128xbf16>
    %7 = vector.shape_cast %6 : vector<1x32x128xbf16> to vector<32x128xbf16>
    %8 = arith.truncf %5 : vector<8x32xf32> to vector<8x32xbf16>
    %cst_8 = arith.constant dense<0.000000e+00> : vector<8x128xf32>
    %9 = tpu.matmul %8, %7, %cst_8 {dimension_numbers = #tpu.dot_dimension_numbers<[1], [0], [0], [1], [0, 0, 1, 1], [], []>} : vector<8x32xbf16>, vector<32x128xbf16>, vector<8x128xf32> -> vector<8x128xf32>
    %10 = arith.addf %4, %9 : vector<8x128xf32>
    %c0_9 = arith.constant 0 : index
    %c0_10 = arith.constant 0 : index
    %11 = vector.load %arg2[%c0_9, %c0_10] : memref<8x32xf32, #tpu.memory_space<vmem>>, vector<8x32xf32>
    %c2 = arith.constant 2 : index
    %c0_11 = arith.constant 0 : index
    %c0_12 = arith.constant 0 : index
    %12 = vector.load %arg4[%c2, %c0_11, %c0_12] : memref<4x32x128xbf16, #tpu.memory_space<vmem>>, vector<1x32x128xbf16>
    %13 = vector.shape_cast %12 : vector<1x32x128xbf16> to vector<32x128xbf16>
    %14 = arith.truncf %11 : vector<8x32xf32> to vector<8x32xbf16>
    %cst_13 = arith.constant dense<0.000000e+00> : vector<8x128xf32>
    %15 = tpu.matmul %14, %13, %cst_13 {dimension_numbers = #tpu.dot_dimension_numbers<[1], [0], [0], [1], [0, 0, 1, 1], [], []>} : vector<8x32xbf16>, vector<32x128xbf16>, vector<8x128xf32> -> vector<8x128xf32>
    %16 = arith.addf %10, %15 : vector<8x128xf32>
    %c0_14 = arith.constant 0 : index
    %c0_15 = arith.constant 0 : index
    %17 = vector.load %arg3[%c0_14, %c0_15] : memref<8x32xf32, #tpu.memory_space<vmem>>, vector<8x32xf32>
    %c3 = arith.constant 3 : index
    %c0_16 = arith.constant 0 : index
    %c0_17 = arith.constant 0 : index
    %18 = vector.load %arg4[%c3, %c0_16, %c0_17] : memref<4x32x128xbf16, #tpu.memory_space<vmem>>, vector<1x32x128xbf16>
    %19 = vector.shape_cast %18 : vector<1x32x128xbf16> to vector<32x128xbf16>
    %20 = arith.truncf %17 : vector<8x32xf32> to vector<8x32xbf16>
    %cst_18 = arith.constant dense<0.000000e+00> : vector<8x128xf32>
    %21 = tpu.matmul %20, %19, %cst_18 {dimension_numbers = #tpu.dot_dimension_numbers<[1], [0], [0], [1], [0, 0, 1, 1], [], []>} : vector<8x32xbf16>, vector<32x128xbf16>, vector<8x128xf32> -> vector<8x128xf32>
    %22 = arith.addf %16, %21 : vector<8x128xf32>
    %c0_19 = arith.constant 0 : index
    %c0_20 = arith.constant 0 : index
    %23 = vector.load %arg5[%c0_19, %c0_20] : memref<1x128xf32, #tpu.memory_space<vmem>>, vector<1x128xf32>
    %24 = vector.broadcast %23 : vector<1x128xf32> to vector<8x128xf32>
    %25 = arith.addf %22, %24 : vector<8x128xf32>
    %cst_21 = arith.constant 2.000000e-01 : f32
    %26 = vector.broadcast %cst_21 : f32 to vector<8x128xf32>
    %27 = arith.mulf %26, %25 : vector<8x128xf32>
    %28 = arith.maximumf %25, %27 : vector<8x128xf32>
    %cst_22 = arith.constant dense<0.000000e+00> : vector<128xf32>
    %29 = vector.multi_reduction <add>, %28, %cst_22 [0] : vector<8x128xf32> to vector<128xf32>
    %30 = vector.shape_cast %29 : vector<128xf32> to vector<1x128xf32>
    %cst_23 = arith.constant 8.000000e+00 : f32
    %31 = vector.broadcast %cst_23 : f32 to vector<1x128xf32>
    %32 = arith.divf %30, %31 : vector<1x128xf32>
    %33 = vector.broadcast %32 : vector<1x128xf32> to vector<8x128xf32>
    %34 = arith.subf %28, %33 : vector<8x128xf32>
    %35 = arith.mulf %34, %34 : vector<8x128xf32>
    %cst_24 = arith.constant dense<0.000000e+00> : vector<128xf32>
    %36 = vector.multi_reduction <add>, %35, %cst_24 [0] : vector<8x128xf32> to vector<128xf32>
    %37 = vector.shape_cast %36 : vector<128xf32> to vector<1x128xf32>
    %cst_25 = arith.constant 8.000000e+00 : f32
    %38 = vector.broadcast %cst_25 : f32 to vector<1x128xf32>
    %39 = arith.divf %37, %38 : vector<1x128xf32>
    %cst_26 = arith.constant 9.99999974E-6 : f32
    %40 = vector.broadcast %cst_26 : f32 to vector<1x128xf32>
    %41 = arith.addf %39, %40 : vector<1x128xf32>
    %42 = math.rsqrt %41 : vector<1x128xf32>
    %c0_27 = arith.constant 0 : index
    %c0_28 = arith.constant 0 : index
    %43 = vector.load %arg6[%c0_27, %c0_28] : memref<1x128xf32, #tpu.memory_space<vmem>>, vector<1x128xf32>
    %44 = arith.mulf %42, %43 : vector<1x128xf32>
    %45 = vector.broadcast %44 : vector<1x128xf32> to vector<8x128xf32>
    %46 = arith.mulf %34, %45 : vector<8x128xf32>
    %c0_29 = arith.constant 0 : index
    %c0_30 = arith.constant 0 : index
    %47 = vector.load %arg7[%c0_29, %c0_30] : memref<1x128xf32, #tpu.memory_space<vmem>>, vector<1x128xf32>
    %48 = vector.broadcast %47 : vector<1x128xf32> to vector<8x128xf32>
    %49 = arith.addf %46, %48 : vector<8x128xf32>
    %c0_31 = arith.constant 0 : index
    %c0_32 = arith.constant 0 : index
    %50 = vector.load %arg8[%c0_31, %c0_32] : memref<128x128xbf16, #tpu.memory_space<vmem>>, vector<128x128xbf16>
    %51 = arith.truncf %49 : vector<8x128xf32> to vector<8x128xbf16>
    %cst_33 = arith.constant dense<0.000000e+00> : vector<8x128xf32>
    %52 = tpu.matmul %51, %50, %cst_33 {dimension_numbers = #tpu.dot_dimension_numbers<[1], [0], [0], [1], [0, 0, 1, 1], [], []>} : vector<8x128xbf16>, vector<128x128xbf16>, vector<8x128xf32> -> vector<8x128xf32>
    %c0_34 = arith.constant 0 : index
    %c0_35 = arith.constant 0 : index
    %53 = vector.load %arg9[%c0_34, %c0_35] : memref<1x128xf32, #tpu.memory_space<vmem>>, vector<1x128xf32>
    %54 = vector.broadcast %53 : vector<1x128xf32> to vector<8x128xf32>
    %55 = arith.addf %52, %54 : vector<8x128xf32>
    %cst_36 = arith.constant 2.000000e-01 : f32
    %56 = vector.broadcast %cst_36 : f32 to vector<8x128xf32>
    %57 = arith.mulf %56, %55 : vector<8x128xf32>
    %58 = arith.maximumf %55, %57 : vector<8x128xf32>
    %cst_37 = arith.constant dense<0.000000e+00> : vector<128xf32>
    %59 = vector.multi_reduction <add>, %58, %cst_37 [0] : vector<8x128xf32> to vector<128xf32>
    %60 = vector.shape_cast %59 : vector<128xf32> to vector<1x128xf32>
    %cst_38 = arith.constant 8.000000e+00 : f32
    %61 = vector.broadcast %cst_38 : f32 to vector<1x128xf32>
    %62 = arith.divf %60, %61 : vector<1x128xf32>
    %63 = vector.broadcast %62 : vector<1x128xf32> to vector<8x128xf32>
    %64 = arith.subf %58, %63 : vector<8x128xf32>
    %65 = arith.mulf %64, %64 : vector<8x128xf32>
    %cst_39 = arith.constant dense<0.000000e+00> : vector<128xf32>
    %66 = vector.multi_reduction <add>, %65, %cst_39 [0] : vector<8x128xf32> to vector<128xf32>
    %67 = vector.shape_cast %66 : vector<128xf32> to vector<1x128xf32>
    %cst_40 = arith.constant 8.000000e+00 : f32
    %68 = vector.broadcast %cst_40 : f32 to vector<1x128xf32>
    %69 = arith.divf %67, %68 : vector<1x128xf32>
    %cst_41 = arith.constant 9.99999974E-6 : f32
    %70 = vector.broadcast %cst_41 : f32 to vector<1x128xf32>
    %71 = arith.addf %69, %70 : vector<1x128xf32>
    %72 = math.rsqrt %71 : vector<1x128xf32>
    %c0_42 = arith.constant 0 : index
    %c0_43 = arith.constant 0 : index
    %73 = vector.load %arg10[%c0_42, %c0_43] : memref<1x128xf32, #tpu.memory_space<vmem>>, vector<1x128xf32>
    %74 = arith.mulf %72, %73 : vector<1x128xf32>
    %75 = vector.broadcast %74 : vector<1x128xf32> to vector<8x128xf32>
    %76 = arith.mulf %64, %75 : vector<8x128xf32>
    %c0_44 = arith.constant 0 : index
    %c0_45 = arith.constant 0 : index
    %77 = vector.load %arg11[%c0_44, %c0_45] : memref<1x128xf32, #tpu.memory_space<vmem>>, vector<1x128xf32>
    %78 = vector.broadcast %77 : vector<1x128xf32> to vector<8x128xf32>
    %79 = arith.addf %76, %78 : vector<8x128xf32>
    %c0_46 = arith.constant 0 : index
    %c0_47 = arith.constant 0 : index
    %80 = vector.load %arg12[%c0_46, %c0_47] : memref<128x128xbf16, #tpu.memory_space<vmem>>, vector<128x128xbf16>
    %81 = arith.truncf %79 : vector<8x128xf32> to vector<8x128xbf16>
    %cst_48 = arith.constant dense<0.000000e+00> : vector<8x128xf32>
    %82 = tpu.matmul %81, %80, %cst_48 {dimension_numbers = #tpu.dot_dimension_numbers<[1], [0], [0], [1], [0, 0, 1, 1], [], []>} : vector<8x128xbf16>, vector<128x128xbf16>, vector<8x128xf32> -> vector<8x128xf32>
    %c0_49 = arith.constant 0 : index
    %c0_50 = arith.constant 0 : index
    %83 = vector.load %arg13[%c0_49, %c0_50] : memref<1x128xf32, #tpu.memory_space<vmem>>, vector<1x128xf32>
    %84 = vector.broadcast %83 : vector<1x128xf32> to vector<8x128xf32>
    %85 = arith.addf %82, %84 : vector<8x128xf32>
    %cst_51 = arith.constant 2.000000e-01 : f32
    %86 = vector.broadcast %cst_51 : f32 to vector<8x128xf32>
    %87 = arith.mulf %86, %85 : vector<8x128xf32>
    %88 = arith.maximumf %85, %87 : vector<8x128xf32>
    %cst_52 = arith.constant dense<0.000000e+00> : vector<128xf32>
    %89 = vector.multi_reduction <add>, %88, %cst_52 [0] : vector<8x128xf32> to vector<128xf32>
    %90 = vector.shape_cast %89 : vector<128xf32> to vector<1x128xf32>
    %cst_53 = arith.constant 8.000000e+00 : f32
    %91 = vector.broadcast %cst_53 : f32 to vector<1x128xf32>
    %92 = arith.divf %90, %91 : vector<1x128xf32>
    %93 = vector.broadcast %92 : vector<1x128xf32> to vector<8x128xf32>
    %94 = arith.subf %88, %93 : vector<8x128xf32>
    %95 = arith.mulf %94, %94 : vector<8x128xf32>
    %cst_54 = arith.constant dense<0.000000e+00> : vector<128xf32>
    %96 = vector.multi_reduction <add>, %95, %cst_54 [0] : vector<8x128xf32> to vector<128xf32>
    %97 = vector.shape_cast %96 : vector<128xf32> to vector<1x128xf32>
    %cst_55 = arith.constant 8.000000e+00 : f32
    %98 = vector.broadcast %cst_55 : f32 to vector<1x128xf32>
    %99 = arith.divf %97, %98 : vector<1x128xf32>
    %cst_56 = arith.constant 9.99999974E-6 : f32
    %100 = vector.broadcast %cst_56 : f32 to vector<1x128xf32>
    %101 = arith.addf %99, %100 : vector<1x128xf32>
    %102 = math.rsqrt %101 : vector<1x128xf32>
    %c0_57 = arith.constant 0 : index
    %c0_58 = arith.constant 0 : index
    %103 = vector.load %arg14[%c0_57, %c0_58] : memref<1x128xf32, #tpu.memory_space<vmem>>, vector<1x128xf32>
    %104 = arith.mulf %102, %103 : vector<1x128xf32>
    %105 = vector.broadcast %104 : vector<1x128xf32> to vector<8x128xf32>
    %106 = arith.mulf %94, %105 : vector<8x128xf32>
    %c0_59 = arith.constant 0 : index
    %c0_60 = arith.constant 0 : index
    %107 = vector.load %arg15[%c0_59, %c0_60] : memref<1x128xf32, #tpu.memory_space<vmem>>, vector<1x128xf32>
    %108 = vector.broadcast %107 : vector<1x128xf32> to vector<8x128xf32>
    %109 = arith.addf %106, %108 : vector<8x128xf32>
    %c0_61 = arith.constant 0 : index
    %c0_62 = arith.constant 0 : index
    %110 = vector.load %arg16[%c0_61, %c0_62] : memref<128x128xbf16, #tpu.memory_space<vmem>>, vector<128x128xbf16>
    %111 = arith.truncf %109 : vector<8x128xf32> to vector<8x128xbf16>
    %cst_63 = arith.constant dense<0.000000e+00> : vector<8x128xf32>
    %112 = tpu.matmul %111, %110, %cst_63 {dimension_numbers = #tpu.dot_dimension_numbers<[1], [0], [0], [1], [0, 0, 1, 1], [], []>} : vector<8x128xbf16>, vector<128x128xbf16>, vector<8x128xf32> -> vector<8x128xf32>
    %c0_64 = arith.constant 0 : index
    %c0_65 = arith.constant 0 : index
    %113 = vector.load %arg17[%c0_64, %c0_65] : memref<1x128xf32, #tpu.memory_space<vmem>>, vector<1x128xf32>
    %114 = vector.broadcast %113 : vector<1x128xf32> to vector<8x128xf32>
    %115 = arith.addf %112, %114 : vector<8x128xf32>
    %cst_66 = arith.constant 2.000000e-01 : f32
    %116 = vector.broadcast %cst_66 : f32 to vector<8x128xf32>
    %117 = arith.mulf %116, %115 : vector<8x128xf32>
    %118 = arith.maximumf %115, %117 : vector<8x128xf32>
    %c0_67 = arith.constant 0 : index
    %c0_68 = arith.constant 0 : index
    %119 = vector.load %arg18[%c0_67, %c0_68] : memref<8x128xf32, #tpu.memory_space<vmem>>, vector<8x128xf32>
    tpu.vector_store %arg18[%c0_67, %c0_68], %118 {strides = array<i32>} : memref<8x128xf32, #tpu.memory_space<vmem>>, vector<8x128xf32>,
    return
  }
}

</mosaic_0001>

<llo_original>
// kernel: tpu_custom_call.1
$region0: #{tpu_custom_call.1}
  #allocation0 [shape = 'u32[]', space=smem, size = 0x4, offset = 0x4, fixed_abs, tag = 'smem constant byte address 0x4 - core index']
  #allocation1 [shape = 'u32[144,128]{1,0:T(1,128)}', space=vmem, size = 0x12000, scoped, tag = 'internal scratch']
  %s0 = inlined_call_operand.hbm [shape: f32[8,32], index: 0, kind: input, shape index: {}]
  %s1 = inlined_call_operand.hbm [shape: f32[8,32], index: 1, kind: input, shape index: {}]
  %s2 = inlined_call_operand.hbm [shape: f32[8,32], index: 2, kind: input, shape index: {}]
  %s3 = inlined_call_operand.vmem [shape: f32[8,32], index: 3, kind: input, shape index: {}]
  %s4 = inlined_call_operand.hbm [shape: bf16[4,32,128], index: 4, kind: input, shape index: {}]
  %s5 = inlined_call_operand.vmem [shape: f32[1,128], index: 5, kind: input, shape index: {}]
  %s6 = inlined_call_operand.vmem [shape: f32[1,128], index: 6, kind: input, shape index: {}]
  %s7 = inlined_call_operand.vmem [shape: f32[1,128], index: 7, kind: input, shape index: {}]
  %s8 = inlined_call_operand.hbm [shape: bf16[128,128], index: 8, kind: input, shape index: {}]
  %s9 = inlined_call_operand.vmem [shape: f32[1,128], index: 9, kind: input, shape index: {}]
  %s10 = inlined_call_operand.vmem [shape: f32[1,128], index: 10, kind: input, shape index: {}]
  %s11 = inlined_call_operand.vmem [shape: f32[1,128], index: 11, kind: input, shape index: {}]
  %s12 = inlined_call_operand.hbm [shape: bf16[128,128], index: 12, kind: input, shape index: {}]
  %s13 = inlined_call_operand.vmem [shape: f32[1,128], index: 13, kind: input, shape index: {}]
  %s14 = inlined_call_operand.vmem [shape: f32[1,128], index: 14, kind: input, shape index: {}]
  %s15 = inlined_call_operand.vmem [shape: f32[1,128], index: 15, kind: input, shape index: {}]
  %s16 = inlined_call_operand.hbm [shape: bf16[128,128], index: 16, kind: input, shape index: {}]
  %s17 = inlined_call_operand.vmem [shape: f32[1,128], index: 17, kind: input, shape index: {}]
  %s18 = inlined_call_operand.hbm [shape: f32[8,128], index: 18, kind: output, shape index: {}]
  %s19 = sld [smem:[#allocation0]]
  $region110: #{tpu_custom_call.1} parent=0
    _
  %s21 = ssub.s32 1, %s19
  %s22 = scalar_select 0, %s21, %s19
  $region1: #{tpu_custom_call.1} parent=0
    #allocation2 [shape = 'u8[4096]{0}', space=vmem, size = 0x1000, scoped, tag = 'input window, operand 0, single buffered']
    #allocation3 [shape = 's32[1]{0}', space=sflag, size = 0x4, scoped, tag = 'scoped memory for tpu_custom_call.1']
    #allocation4 [shape = 's32[1]{0}', space=sflag, size = 0x4, scoped, tag = 'scoped memory for tpu_custom_call.1']
    #allocation5 [shape = 'u8[4096]{0}', space=vmem, size = 0x1000, scoped, tag = 'input window, operand 1, single buffered']
    #allocation6 [shape = 's32[1]{0}', space=sflag, size = 0x4, scoped, tag = 'scoped memory for tpu_custom_call.1']
    #allocation7 [shape = 'u8[4096]{0}', space=vmem, size = 0x1000, scoped, tag = 'input window, operand 2, single buffered']
    #allocation8 [shape = 'u8[32768]{0}', space=vmem, size = 0x8000, scoped, tag = 'input window, operand 4, single buffered']
    #allocation9 [shape = 's32[1]{0}', space=sflag, size = 0x4, scoped, tag = 'scoped memory for tpu_custom_call.1']
    #allocation10 [shape = 'u8[32768]{0}', space=vmem, size = 0x8000, scoped, tag = 'input window, operand 8, single buffered']
    #allocation11 [shape = 'u8[32768]{0}', space=vmem, size = 0x8000, scoped, tag = 'input window, operand 12, single buffered']
    #allocation12 [shape = 's32[1]{0}', space=sflag, size = 0x4, scoped, tag = 'scoped memory for tpu_custom_call.1']
    #allocation13 [shape = 'u8[32768]{0}', space=vmem, size = 0x8000, scoped, tag = 'input window, operand 16, single buffered']
    #allocation14 [shape = 'u8[4096]{0}', space=vmem, size = 0x1000, scoped, tag = 'output window, operand 0, single buffered']
    %23 = vsyncpa [#allocation3], 0
    %24 = vsyncpa [#allocation6], 0
    %25 = vsyncpa [#allocation9], 0
    %26 = vsyncpa [#allocation12], 0
    %27 = vsyncpa [#allocation4], 0
    // Predicated region
    $region2: #{tpu_custom_call.1} parent=1 // pred_check
      _
    $region3: #{tpu_custom_call.1} parent=1 // pred_check_branch
      %29 = sbr.rel (0) target = $region5
    $region4: #{tpu_custom_call.1} parent=1 // pred_region
      %s31 = ssub.s32 128, 128
      %32 = vsyncadd [#allocation3], %s31
      %s34 = sshll.u32 [#allocation2], 4
      %s35 = int_to_ptr.vmem [resolvable:$true] %s34
      %37 = dma.hbm_to_vmem [thread:$0]  %s0, 128, %s35, [#allocation3]
    $region5: #{tpu_custom_call.1} parent=1 // pred_fallthru
      _
    // Predicated region
    $region6: #{tpu_custom_call.1} parent=1 // pred_check
      _
    $region7: #{tpu_custom_call.1} parent=1 // pred_check_branch
      %39 = sbr.rel (0) target = $region9
    $region8: #{tpu_custom_call.1} parent=1 // pred_region
      %s41 = ssub.s32 128, 128
      %42 = vsyncadd [#allocation6], %s41
      %s44 = sshll.u32 [#allocation5], 4
      %s45 = int_to_ptr.vmem [resolvable:$true] %s44
      %47 = dma.hbm_to_vmem [thread:$0]  %s1, 128, %s45, [#allocation6]
    $region9: #{tpu_custom_call.1} parent=1 // pred_fallthru
      _
    // Predicated region
    $region10: #{tpu_custom_call.1} parent=1 // pred_check
      _
    $region11: #{tpu_custom_call.1} parent=1 // pred_check_branch
      %49 = sbr.rel (0) target = $region13
    $region12: #{tpu_custom_call.1} parent=1 // pred_region
      %s51 = ssub.s32 128, 128
      %52 = vsyncadd [#allocation6], %s51
      %s54 = sshll.u32 [#allocation7], 4
      %s55 = int_to_ptr.vmem [resolvable:$true] %s54
      %57 = dma.hbm_to_vmem [thread:$0]  %s2, 128, %s55, [#allocation6]
    $region13: #{tpu_custom_call.1} parent=1 // pred_fallthru
      _
    // Predicated region
    $region14: #{tpu_custom_call.1} parent=1 // pred_check
      _
    $region15: #{tpu_custom_call.1} parent=1 // pred_check_branch
      %59 = sbr.rel (0) target = $region17
    $region16: #{tpu_custom_call.1} parent=1 // pred_region
      _
    $region17: #{tpu_custom_call.1} parent=1 // pred_fallthru
      _
    // Predicated region
    $region18: #{tpu_custom_call.1} parent=1 // pred_check
      _
    $region19: #{tpu_custom_call.1} parent=1 // pred_check_branch
      %61 = sbr.rel (0) target = $region21
    $region20: #{tpu_custom_call.1} parent=1 // pred_region
      %s63 = ssub.s32 1024, 1024
      %64 = vsyncadd [#allocation9], %s63
      %s65 = sshll.u32 [#allocation8], 4
      %s66 = int_to_ptr.vmem [resolvable:$true] %s65
      %71 = dma.hbm_to_vmem [thread:$0]  %s4, 1024, %s66, [#allocation9], 64, 64, 4
    $region21: #{tpu_custom_call.1} parent=1 // pred_fallthru
      _
    // Predicated region
    $region22: #{tpu_custom_call.1} parent=1 // pred_check
      _
    $region23: #{tpu_custom_call.1} parent=1 // pred_check_branch
      %73 = sbr.rel (0) target = $region25
    $region24: #{tpu_custom_call.1} parent=1 // pred_region
      _
    $region25: #{tpu_custom_call.1} parent=1 // pred_fallthru
      _
    // Predicated region
    $region26: #{tpu_custom_call.1} parent=1 // pred_check
      _
    $region27: #{tpu_custom_call.1} parent=1 // pred_check_branch
      %75 = sbr.rel (0) target = $region29
    $region28: #{tpu_custom_call.1} parent=1 // pred_region
      _
    $region29: #{tpu_custom_call.1} parent=1 // pred_fallthru
      _
    // Predicated region
    $region30: #{tpu_custom_call.1} parent=1 // pred_check
      _
    $region31: #{tpu_custom_call.1} parent=1 // pred_check_branch
      %77 = sbr.rel (0) target = $region33
    $region32: #{tpu_custom_call.1} parent=1 // pred_region
      _
    $region33: #{tpu_custom_call.1} parent=1 // pred_fallthru
      _
    // Predicated region
    $region34: #{tpu_custom_call.1} parent=1 // pred_check
      _
    $region35: #{tpu_custom_call.1} parent=1 // pred_check_branch
      %79 = sbr.rel (0) target = $region37
    $region36: #{tpu_custom_call.1} parent=1 // pred_region
      %s81 = ssub.s32 1024, 1024
      %82 = vsyncadd [#allocation9], %s81
      %s83 = sshll.u32 [#allocation10], 4
      %s84 = int_to_ptr.vmem [resolvable:$true] %s83
      %89 = dma.hbm_to_vmem [thread:$0]  %s8, 1024, %s84, [#allocation9], 64, 64, 4
    $region37: #{tpu_custom_call.1} parent=1 // pred_fallthru
      _
    // Predicated region
    $region38: #{tpu_custom_call.1} parent=1 // pred_check
      _
    $region39: #{tpu_custom_call.1} parent=1 // pred_check_branch
      %91 = sbr.rel (0) target = $region41
    $region40: #{tpu_custom_call.1} parent=1 // pred_region
      _
    $region41: #{tpu_custom_call.1} parent=1 // pred_fallthru
      _
    // Predicated region
    $region42: #{tpu_custom_call.1} parent=1 // pred_check
      _
    $region43: #{tpu_custom_call.1} parent=1 // pred_check_branch
      %93 = sbr.rel (0) target = $region45
    $region44: #{tpu_custom_call.1} parent=1 // pred_region
      _
    $region45: #{tpu_custom_call.1} parent=1 // pred_fallthru
      _
    // Predicated region
    $region46: #{tpu_custom_call.1} parent=1 // pred_check
      _
    $region47: #{tpu_custom_call.1} parent=1 // pred_check_branch
      %95 = sbr.rel (0) target = $region49
    $region48: #{tpu_custom_call.1} parent=1 // pred_region
      _
    $region49: #{tpu_custom_call.1} parent=1 // pred_fallthru
      _
    // Predicated region
    $region50: #{tpu_custom_call.1} parent=1 // pred_check
      _
    $region51: #{tpu_custom_call.1} parent=1 // pred_check_branch
      %97 = sbr.rel (0) target = $region53
    $region52: #{tpu_custom_call.1} parent=1 // pred_region
      %s99 = ssub.s32 1024, 1024
      %100 = vsyncadd [#allocation12], %s99
      %s101 = sshll.u32 [#allocation11], 4
      %s102 = int_to_ptr.vmem [resolvable:$true] %s101
      %107 = dma.hbm_to_vmem [thread:$0]  %s12, 1024, %s102, [#allocation12], 64, 64, 4
    $region53: #{tpu_custom_call.1} parent=1 // pred_fallthru
      _
    // Predicated region
    $region54: #{tpu_custom_call.1} parent=1 // pred_check
      _
    $region55: #{tpu_custom_call.1} parent=1 // pred_check_branch
      %109 = sbr.rel (0) target = $region57
    $region56: #{tpu_custom_call.1} parent=1 // pred_region
      _
    $region57: #{tpu_custom_call.1} parent=1 // pred_fallthru
      _
    // Predicated region
    $region58: #{tpu_custom_call.1} parent=1 // pred_check
      _
    $region59: #{tpu_custom_call.1} parent=1 // pred_check_branch
      %111 = sbr.rel (0) target = $region61
    $region60: #{tpu_custom_call.1} parent=1 // pred_region
      _
    $region61: #{tpu_custom_call.1} parent=1 // pred_fallthru
      _
    // Predicated region
    $region62: #{tpu_custom_call.1} parent=1 // pred_check
      _
    $region63: #{tpu_custom_call.1} parent=1 // pred_check_branch
      %113 = sbr.rel (0) target = $region65
    $region64: #{tpu_custom_call.1} parent=1 // pred_region
      _
    $region65: #{tpu_custom_call.1} parent=1 // pred_fallthru
      _
    // Predicated region
    $region66: #{tpu_custom_call.1} parent=1 // pred_check
      _
    $region67: #{tpu_custom_call.1} parent=1 // pred_check_branch
      %115 = sbr.rel (0) target = $region69
    $region68: #{tpu_custom_call.1} parent=1 // pred_region
      %s117 = ssub.s32 1024, 1024
      %118 = vsyncadd [#allocation12], %s117
      %s119 = sshll.u32 [#allocation13], 4
      %s120 = int_to_ptr.vmem [resolvable:$true] %s119
      %125 = dma.hbm_to_vmem [thread:$0]  %s16, 1024, %s120, [#allocation12], 64, 64, 4
    $region69: #{tpu_custom_call.1} parent=1 // pred_fallthru
      _
    // Predicated region
    $region70: #{tpu_custom_call.1} parent=1 // pred_check
      _
    $region71: #{tpu_custom_call.1} parent=1 // pred_check_branch
      %127 = sbr.rel (0) target = $region73
    $region72: #{tpu_custom_call.1} parent=1 // pred_region
      _
    $region73: #{tpu_custom_call.1} parent=1 // pred_fallthru
      _
    // Predicated region
    $region74: #{tpu_custom_call.1} parent=1 // pred_check
      _
    $region75: #{tpu_custom_call.1} parent=1 // pred_check_branch
      %129 = sbr.rel (0) target = $region77
    $region76: #{tpu_custom_call.1} parent=1 // pred_region
      %130 = dma.done [#allocation3], 128
    $region77: #{tpu_custom_call.1} parent=1 // pred_fallthru
      _
    // Predicated region
    $region78: #{tpu_custom_call.1} parent=1 // pred_check
      _
    $region79: #{tpu_custom_call.1} parent=1 // pred_check_branch
      %132 = sbr.rel (0) target = $region81
    $region80: #{tpu_custom_call.1} parent=1 // pred_region
      %133 = dma.done [#allocation6], 128
    $region81: #{tpu_custom_call.1} parent=1 // pred_fallthru
      _
    // Predicated region
    $region82: #{tpu_custom_call.1} parent=1 // pred_check
      _
    $region83: #{tpu_custom_call.1} parent=1 // pred_check_branch
      %135 = sbr.rel (0) target = $region85
    $region84: #{tpu_custom_call.1} parent=1 // pred_region
      %136 = dma.done [#allocation6], 128
    $region85: #{tpu_custom_call.1} parent=1 // pred_fallthru
      _
    // Predicated region
    $region86: #{tpu_custom_call.1} parent=1 // pred_check
      _
    $region87: #{tpu_custom_call.1} parent=1 // pred_check_branch
      %138 = sbr.rel (0) target = $region89
    $region88: #{tpu_custom_call.1} parent=1 // pred_region
      %139 = dma.done [#allocation9], 1024
    $region89: #{tpu_custom_call.1} parent=1 // pred_fallthru
      _
    // Predicated region
    $region90: #{tpu_custom_call.1} parent=1 // pred_check
      _
    $region91: #{tpu_custom_call.1} parent=1 // pred_check_branch
      %141 = sbr.rel (0) target = $region93
    $region92: #{tpu_custom_call.1} parent=1 // pred_region
      %142 = dma.done [#allocation9], 1024
    $region93: #{tpu_custom_call.1} parent=1 // pred_fallthru
      _
    // Predicated region
    $region94: #{tpu_custom_call.1} parent=1 // pred_check
      _
    $region95: #{tpu_custom_call.1} parent=1 // pred_check_branch
      %144 = sbr.rel (0) target = $region97
    $region96: #{tpu_custom_call.1} parent=1 // pred_region
      %145 = dma.done [#allocation12], 1024
    $region97: #{tpu_custom_call.1} parent=1 // pred_fallthru
      _
    // Predicated region
    $region98: #{tpu_custom_call.1} parent=1 // pred_check
      _
    $region99: #{tpu_custom_call.1} parent=1 // pred_check_branch
      %147 = sbr.rel (0) target = $region101
    $region100: #{tpu_custom_call.1} parent=1 // pred_region
      %148 = dma.done [#allocation12], 1024
    $region101: #{tpu_custom_call.1} parent=1 // pred_fallthru
      _
    %v150 = vld [vmem:[#allocation2] sm:$0xff]
    %v151 = vld [vmem:[#allocation8] sm:$0xf]
    %v152 = vld [vmem:[#allocation8 + $0x4] sm:$0xf]
    %v153 = vld [vmem:[#allocation8 + $0x8] sm:$0xf]
    %v154 = vld [vmem:[#allocation8 + $0xc] sm:$0xf]
    %v155 = vpack.c.bf16 %v150, %v150
    %v156 = vld [vmem:[#allocation5] sm:$0xff]
    %s157 = scalar_lea.vmem [#allocation8], 16
    %v158 = vld [vmem:[%s157] sm:$0xf]
    %v159 = vld [vmem:[%s157 + $0x4] sm:$0xf]
    %v160 = vld [vmem:[%s157 + $0x8] sm:$0xf]
    %v161 = vld [vmem:[%s157 + $0xc] sm:$0xf]
    %v162 = vpack.c.bf16 %v156, %v156
    %v167 = vunpack.c.l.b16 %v158
    %v168 = vunpack.c.l.b16 %v159
    %v169 = vunpack.c.l.b16 %v160
    %v170 = vunpack.c.l.b16 %v161
    %v171 = vpack.c.b16 %v168, %v167
    %v172 = vpack.c.b16 %v170, %v169
    %vm175 = vcmask 261120
    %v177 = vsel %vm175, %v162, 0
    %179 = vmatprep.subr.bf16.mxu0 0
    %180 = vmatpush1.bf16.msra.mxu0 %v171
    %181 = vmatprep.subr.bf16.mxu0 0
    %182 = vmatpush1.bf16.msra.mxu0 %v172
    %183 = vmatprep.subr.bf16.mxu0 0
    %184 = vmatpush1.bf16.msra.mxu0 0
    %185 = vmatprep.subr.bf16.mxu0 0
    %186 = vmatpush1.bf16.msra.mxu0 0
    %187 = vmatprep.subr.bf16.mxu0 0
    %188 = vmatpush1.bf16.msra.mxu0 0
    %189 = vmatprep.subr.bf16.mxu0 0
    %190 = vmatpush1.bf16.msra.mxu0 0
    %191 = vmatprep.subr.bf16.mxu0 0
    %192 = vmatpush1.bf16.msra.mxu0 0
    %193 = vmatprep.subr.bf16.mxu0 0
    %194 = vmatpush1.bf16.msra.mxu0 0
    %195 = vmatprep.subr.bf16.mxu0 0
    %196 = vmatpush1.bf16.msra.mxu0 0
    %197 = vmatprep.subr.bf16.mxu0 0
    %198 = vmatpush1.bf16.msra.mxu0 0
    %199 = vmatprep.subr.bf16.mxu0 0
    %200 = vmatpush1.bf16.msra.mxu0 0
    %201 = vmatprep.subr.bf16.mxu0 0
    %202 = vmatpush1.bf16.msra.mxu0 0
    %203 = vmatprep.subr.bf16.mxu0 0
    %204 = vmatpush1.bf16.msra.mxu0 0
    %205 = vmatprep.subr.bf16.mxu0 0
    %206 = vmatpush1.bf16.msra.mxu0 0
    %207 = vmatprep.subr.bf16.mxu0 0
    %208 = vmatpush1.bf16.msra.mxu0 0
    %209 = vmatprep.subr.bf16.mxu0 0
    %210 = vmatpush1.bf16.msra.mxu0 0
    %211 = vmatprep.mubr.bf16.mxu0 0
    %212 = vmatmul.mubr.bf16.gmra.mrb[0].mxu0 %v177
    %v213 = vpop.f32.mrb[0].mxu0
    %v214 = vadd.f32 0.0, %v213
    %v215 = vpop.f32.mrb[0].mxu0
    %v216 = vpop.f32.mrb[0].mxu0
    %v217 = vpop.f32.mrb[0].mxu0
    %218 = vdwg.mxu0
    %v223 = vunpack.c.l.b16 %v151
    %v224 = vunpack.c.l.b16 %v152
    %v225 = vunpack.c.l.b16 %v153
    %v226 = vunpack.c.l.b16 %v154
    %v227 = vpack.c.b16 %v224, %v223
    %v228 = vpack.c.b16 %v226, %v225
    %v232 = vsel %vm175, %v155, 0
    %234 = vmatprep.subr.bf16.mxu0 0
    %235 = vmatpush1.bf16.msra.mxu0 %v227
    %236 = vmatprep.subr.bf16.mxu0 0
    %237 = vmatpush1.bf16.msra.mxu0 %v228
    %238 = vmatprep.subr.bf16.mxu0 0
    %239 = vmatpush1.bf16.msra.mxu0 0
    %240 = vmatprep.subr.bf16.mxu0 0
    %241 = vmatpush1.bf16.msra.mxu0 0
    %242 = vmatprep.subr.bf16.mxu0 0
    %243 = vmatpush1.bf16.msra.mxu0 0
    %244 = vmatprep.subr.bf16.mxu0 0
    %245 = vmatpush1.bf16.msra.mxu0 0
    %246 = vmatprep.subr.bf16.mxu0 0
    %247 = vmatpush1.bf16.msra.mxu0 0
    %248 = vmatprep.subr.bf16.mxu0 0
    %249 = vmatpush1.bf16.msra.mxu0 0
    %250 = vmatprep.subr.bf16.mxu0 0
    %251 = vmatpush1.bf16.msra.mxu0 0
    %252 = vmatprep.subr.bf16.mxu0 0
    %253 = vmatpush1.bf16.msra.mxu0 0
    %254 = vmatprep.subr.bf16.mxu0 0
    %255 = vmatpush1.bf16.msra.mxu0 0
    %256 = vmatprep.subr.bf16.mxu0 0
    %257 = vmatpush1.bf16.msra.mxu0 0
    %258 = vmatprep.subr.bf16.mxu0 0
    %259 = vmatpush1.bf16.msra.mxu0 0
    %260 = vmatprep.subr.bf16.mxu0 0
    %261 = vmatpush1.bf16.msra.mxu0 0
    %262 = vmatprep.subr.bf16.mxu0 0
    %263 = vmatpush1.bf16.msra.mxu0 0
    %264 = vmatprep.subr.bf16.mxu0 0
    %265 = vmatpush1.bf16.msra.mxu0 0
    %266 = vmatprep.mubr.bf16.mxu0 0
    %267 = vmatmul.mubr.bf16.gmra.mrb[0].mxu0 %v232
    %v268 = vpop.f32.mrb[0].mxu0
    %v269 = vadd.f32 %v214, %v268
    %v270 = vpop.f32.mrb[0].mxu0
    %v271 = vpop.f32.mrb[0].mxu0
    %v272 = vpop.f32.mrb[0].mxu0
    %273 = vdwg.mxu0
    %v274 = vld [vmem:[#allocation7] sm:$0xff]
    %s275 = scalar_lea.vmem [#allocation8], 32
    %v276 = vld [vmem:[%s275] sm:$0xf]
    %v277 = vld [vmem:[%s275 + $0x4] sm:$0xf]
    %v278 = vld [vmem:[%s275 + $0x8] sm:$0xf]
    %v279 = vld [vmem:[%s275 + $0xc] sm:$0xf]
    %v280 = vpack.c.bf16 %v274, %v274
    %v285 = vunpack.c.l.b16 %v276
    %v286 = vunpack.c.l.b16 %v277
    %v287 = vunpack.c.l.b16 %v278
    %v288 = vunpack.c.l.b16 %v279
    %v289 = vpack.c.b16 %v286, %v285
    %v290 = vpack.c.b16 %v288, %v287
    %v294 = vsel %vm175, %v280, 0
    %296 = vmatprep.subr.bf16.mxu0 0
    %297 = vmatpush1.bf16.msra.mxu0 %v289
    %298 = vmatprep.subr.bf16.mxu0 0
    %299 = vmatpush1.bf16.msra.mxu0 %v290
    %300 = vmatprep.subr.bf16.mxu0 0
    %301 = vmatpush1.bf16.msra.mxu0 0
    %302 = vmatprep.subr.bf16.mxu0 0
    %303 = vmatpush1.bf16.msra.mxu0 0
    %304 = vmatprep.subr.bf16.mxu0 0
    %305 = vmatpush1.bf16.msra.mxu0 0
    %306 = vmatprep.subr.bf16.mxu0 0
    %307 = vmatpush1.bf16.msra.mxu0 0
    %308 = vmatprep.subr.bf16.mxu0 0
    %309 = vmatpush1.bf16.msra.mxu0 0
    %310 = vmatprep.subr.bf16.mxu0 0
    %311 = vmatpush1.bf16.msra.mxu0 0
    %312 = vmatprep.subr.bf16.mxu0 0
    %313 = vmatpush1.bf16.msra.mxu0 0
    %314 = vmatprep.subr.bf16.mxu0 0
    %315 = vmatpush1.bf16.msra.mxu0 0
    %316 = vmatprep.subr.bf16.mxu0 0
    %317 = vmatpush1.bf16.msra.mxu0 0
    %318 = vmatprep.subr.bf16.mxu0 0
    %319 = vmatpush1.bf16.msra.mxu0 0
    %320 = vmatprep.subr.bf16.mxu0 0
    %321 = vmatpush1.bf16.msra.mxu0 0
    %322 = vmatprep.subr.bf16.mxu0 0
    %323 = vmatpush1.bf16.msra.mxu0 0
    %324 = vmatprep.subr.bf16.mxu0 0
    %325 = vmatpush1.bf16.msra.mxu0 0
    %326 = vmatprep.subr.bf16.mxu0 0
    %327 = vmatpush1.bf16.msra.mxu0 0
    %328 = vmatprep.mubr.bf16.mxu0 0
    %329 = vmatmul.mubr.bf16.gmra.mrb[0].mxu0 %v294
    %v330 = vpop.f32.mrb[0].mxu0
    %v331 = vadd.f32 0.0, %v330
    %v332 = vpop.f32.mrb[0].mxu0
    %v333 = vpop.f32.mrb[0].mxu0
    %v334 = vpop.f32.mrb[0].mxu0
    %335 = vdwg.mxu0
    %v336 = vadd.f32 %v269, %v331
    %v337 = vld [vmem:[%s3] sm:$0xff]
    %s338 = scalar_lea.vmem [#allocation8], 48
    %v339 = vld [vmem:[%s338] sm:$0xf]
    %v340 = vld [vmem:[%s338 + $0x4] sm:$0xf]
    %v341 = vld [vmem:[%s338 + $0x8] sm:$0xf]
    %v342 = vld [vmem:[%s338 + $0xc] sm:$0xf]
    %v343 = vpack.c.bf16 %v337, %v337
    %v348 = vunpack.c.l.b16 %v339
    %v349 = vunpack.c.l.b16 %v340
    %v350 = vunpack.c.l.b16 %v341
    %v351 = vunpack.c.l.b16 %v342
    %v352 = vpack.c.b16 %v349, %v348
    %v353 = vpack.c.b16 %v351, %v350
    %v357 = vsel %vm175, %v343, 0
    %359 = vmatprep.subr.bf16.mxu0 0
    %360 = vmatpush1.bf16.msra.mxu0 %v352
    %361 = vmatprep.subr.bf16.mxu0 0
    %362 = vmatpush1.bf16.msra.mxu0 %v353
    %363 = vmatprep.subr.bf16.mxu0 0
    %364 = vmatpush1.bf16.msra.mxu0 0
    %365 = vmatprep.subr.bf16.mxu0 0
    %366 = vmatpush1.bf16.msra.mxu0 0
    %367 = vmatprep.subr.bf16.mxu0 0
    %368 = vmatpush1.bf16.msra.mxu0 0
    %369 = vmatprep.subr.bf16.mxu0 0
    %370 = vmatpush1.bf16.msra.mxu0 0
    %371 = vmatprep.subr.bf16.mxu0 0
    %372 = vmatpush1.bf16.msra.mxu0 0
    %373 = vmatprep.subr.bf16.mxu0 0
    %374 = vmatpush1.bf16.msra.mxu0 0
    %375 = vmatprep.subr.bf16.mxu0 0
    %376 = vmatpush1.bf16.msra.mxu0 0
    %377 = vmatprep.subr.bf16.mxu0 0
    %378 = vmatpush1.bf16.msra.mxu0 0
    %379 = vmatprep.subr.bf16.mxu0 0
    %380 = vmatpush1.bf16.msra.mxu0 0
    %381 = vmatprep.subr.bf16.mxu0 0
    %382 = vmatpush1.bf16.msra.mxu0 0
    %383 = vmatprep.subr.bf16.mxu0 0
    %384 = vmatpush1.bf16.msra.mxu0 0
    %385 = vmatprep.subr.bf16.mxu0 0
    %386 = vmatpush1.bf16.msra.mxu0 0
    %387 = vmatprep.subr.bf16.mxu0 0
    %388 = vmatpush1.bf16.msra.mxu0 0
    %389 = vmatprep.subr.bf16.mxu0 0
    %390 = vmatpush1.bf16.msra.mxu0 0
    %391 = vmatprep.mubr.bf16.mxu0 0
    %392 = vmatmul.mubr.bf16.gmra.mrb[0].mxu0 %v357
    %v393 = vpop.f32.mrb[0].mxu0
    %v394 = vadd.f32 0.0, %v393
    %v395 = vpop.f32.mrb[0].mxu0
    %v396 = vpop.f32.mrb[0].mxu0
    %v397 = vpop.f32.mrb[0].mxu0
    %398 = vdwg.mxu0
    %v399 = vadd.f32 %v336, %v394
    %v400 = vld [vmem:[%s5] sm:$0x1]
    %v402 = vlaneseq
    %v403 = vshrl.u32 %v402, 7
    %v404 = vsub.s32 0, %v403
    %v405 = vrot.slane %v400, %v404
    %v407 = vadd.f32 %v399, %v405
    %v408 = vmul.f32 %v407, 0.2
    %v409 = vmax.f32 %v407, %v408
    %v410 = vrot.slane %v409, 4
    %v411 = vadd.f32 %v409, %v410
    %v412 = vrot.slane %v411, 2
    %v413 = vadd.f32 %v411, %v412
    %v414 = vrot.slane %v413, 1
    %v415 = vadd.f32 %v413, %v414
    %v416 = vrcp.pop 8.0
    %v417 = vmul.f32 %v415, %v416
    %v418 = vsub.f32 %v409, %v417
    %v419 = vmul.f32 %v418, %v418
    %v420 = vrot.slane %v419, 4
    %v421 = vadd.f32 %v419, %v420
    %v422 = vrot.slane %v421, 2
    %v423 = vadd.f32 %v421, %v422
    %v424 = vrot.slane %v423, 1
    %v425 = vadd.f32 %v423, %v424
    %v426 = vmul.f32 %v425, %v416
    %v427 = vadd.f32 %v426, 1e-05
    %v428 = vrsqrt.pop %v427
    %v429 = vld [vmem:[%s6] sm:$0x1]
    %v430 = vmul.f32 %v428, %v429
    %v431 = vlaneseq
    %v432 = vshrl.u32 %v431, 7
    %v433 = vsub.s32 0, %v432
    %v434 = vrot.slane %v430, %v433
    %v435 = vmul.f32 %v418, %v434
    %v436 = vld [vmem:[%s7] sm:$0x1]
    %v438 = vlaneseq
    %v439 = vshrl.u32 %v438, 7
    %v440 = vsub.s32 0, %v439
    %v441 = vrot.slane %v436, %v440
    %v443 = vadd.f32 %v435, %v441
    %v444 = vld [vmem:[#allocation10] sm:$0xf]
    %v445 = vld [vmem:[#allocation10 + $0x4] sm:$0xf]
    %v446 = vld [vmem:[#allocation10 + $0x8] sm:$0xf]
    %v447 = vld [vmem:[#allocation10 + $0xc] sm:$0xf]
    %v448 = vld [vmem:[#allocation10 + $0x10] sm:$0xf]
    %v449 = vld [vmem:[#allocation10 + $0x14] sm:$0xf]
    %v450 = vld [vmem:[#allocation10 + $0x18] sm:$0xf]
    %v451 = vld [vmem:[#allocation10 + $0x1c] sm:$0xf]
    %v452 = vld [vmem:[#allocation10 + $0x20] sm:$0xf]
    %v453 = vld [vmem:[#allocation10 + $0x24] sm:$0xf]
    %v454 = vld [vmem:[#allocation10 + $0x28] sm:$0xf]
    %v455 = vld [vmem:[#allocation10 + $0x2c] sm:$0xf]
    %v456 = vld [vmem:[#allocation10 + $0x30] sm:$0xf]
    %v457 = vld [vmem:[#allocation10 + $0x34] sm:$0xf]
    %v458 = vld [vmem:[#allocation10 + $0x38] sm:$0xf]
    %v459 = vld [vmem:[#allocation10 + $0x3c] sm:$0xf]
    %v460 = vpack.c.bf16 %v443, %v443
    %v461 = vld [vmem:[%s9] sm:$0x1]
    %v463 = vlaneseq
    %v464 = vshrl.u32 %v463, 7
    %v465 = vsub.s32 0, %v464
    %v466 = vrot.slane %v461, %v465
    %v484 = vunpack.c.l.b16 %v444
    %v485 = vunpack.c.l.b16 %v445
    %v486 = vunpack.c.l.b16 %v446
    %v487 = vunpack.c.l.b16 %v447
    %v488 = vunpack.c.l.b16 %v448
    %v489 = vunpack.c.l.b16 %v449
    %v490 = vunpack.c.l.b16 %v450
    %v491 = vunpack.c.l.b16 %v451
    %v492 = vunpack.c.l.b16 %v452
    %v493 = vunpack.c.l.b16 %v453
    %v494 = vunpack.c.l.b16 %v454
    %v495 = vunpack.c.l.b16 %v455
    %v496 = vunpack.c.l.b16 %v456
    %v497 = vunpack.c.l.b16 %v457
    %v498 = vunpack.c.l.b16 %v458
    %v499 = vunpack.c.l.b16 %v459
    %v500 = vpack.c.b16 %v485, %v484
    %v501 = vpack.c.b16 %v487, %v486
    %v502 = vpack.c.b16 %v489, %v488
    %v503 = vpack.c.b16 %v491, %v490
    %v504 = vpack.c.b16 %v493, %v492
    %v505 = vpack.c.b16 %v495, %v494
    %v506 = vpack.c.b16 %v497, %v496
    %v507 = vpack.c.b16 %v499, %v498
    %516 = vmatprep.subr.bf16.mxu0 0
    %517 = vmatpush1.bf16.msra.mxu0 %v500
    %518 = vmatprep.subr.bf16.mxu0 0
    %519 = vmatpush1.bf16.msra.mxu0 %v501
    %520 = vmatprep.subr.bf16.mxu0 0
    %521 = vmatpush1.bf16.msra.mxu0 %v502
    %522 = vmatprep.subr.bf16.mxu0 0
    %523 = vmatpush1.bf16.msra.mxu0 %v503
    %524 = vmatprep.subr.bf16.mxu0 0
    %525 = vmatpush1.bf16.msra.mxu0 %v504
    %526 = vmatprep.subr.bf16.mxu0 0
    %527 = vmatpush1.bf16.msra.mxu0 %v505
    %528 = vmatprep.subr.bf16.mxu0 0
    %529 = vmatpush1.bf16.msra.mxu0 %v506
    %530 = vmatprep.subr.bf16.mxu0 0
    %531 = vmatpush1.bf16.msra.mxu0 %v507
    %532 = vmatprep.subr.bf16.mxu0 0
    %533 = vmatpush1.bf16.msra.mxu0 0
    %534 = vmatprep.subr.bf16.mxu0 0
    %535 = vmatpush1.bf16.msra.mxu0 0
    %536 = vmatprep.subr.bf16.mxu0 0
    %537 = vmatpush1.bf16.msra.mxu0 0
    %538 = vmatprep.subr.bf16.mxu0 0
    %539 = vmatpush1.bf16.msra.mxu0 0
    %540 = vmatprep.subr.bf16.mxu0 0
    %541 = vmatpush1.bf16.msra.mxu0 0
    %542 = vmatprep.subr.bf16.mxu0 0
    %543 = vmatpush1.bf16.msra.mxu0 0
    %544 = vmatprep.subr.bf16.mxu0 0
    %545 = vmatpush1.bf16.msra.mxu0 0
    %546 = vmatprep.subr.bf16.mxu0 0
    %547 = vmatpush1.bf16.msra.mxu0 0
    %548 = vmatprep.mubr.bf16.mxu0 0
    %549 = vmatmul.mubr.bf16.gmra.mrb[0].mxu0 %v460
    %v550 = vpop.f32.mrb[0].mxu0
    %v551 = vadd.f32 %v466, %v550
    %v552 = vpop.f32.mrb[0].mxu0
    %v553 = vpop.f32.mrb[0].mxu0
    %v554 = vpop.f32.mrb[0].mxu0
    %555 = vdwg.mxu0
    %v556 = vmul.f32 %v551, 0.2
    %v557 = vmax.f32 %v551, %v556
    %v558 = vrot.slane %v557, 4
    %v559 = vadd.f32 %v557, %v558
    %v560 = vrot.slane %v559, 2
    %v561 = vadd.f32 %v559, %v560
    %v562 = vrot.slane %v561, 1
    %v563 = vadd.f32 %v561, %v562
    %v564 = vmul.f32 %v563, %v416
    %v565 = vsub.f32 %v557, %v564
    %v566 = vmul.f32 %v565, %v565
    %v567 = vrot.slane %v566, 4
    %v568 = vadd.f32 %v566, %v567
    %v569 = vrot.slane %v568, 2
    %v570 = vadd.f32 %v568, %v569
    %v571 = vrot.slane %v570, 1
    %v572 = vadd.f32 %v570, %v571
    %v573 = vmul.f32 %v572, %v416
    %v574 = vadd.f32 %v573, 1e-05
    %v575 = vrsqrt.pop %v574
    %v576 = vld [vmem:[%s10] sm:$0x1]
    %v577 = vmul.f32 %v575, %v576
    %v578 = vlaneseq
    %v579 = vshrl.u32 %v578, 7
    %v580 = vsub.s32 0, %v579
    %v581 = vrot.slane %v577, %v580
    %v582 = vmul.f32 %v565, %v581
    %v583 = vld [vmem:[%s11] sm:$0x1]
    %v585 = vlaneseq
    %v586 = vshrl.u32 %v585, 7
    %v587 = vsub.s32 0, %v586
    %v588 = vrot.slane %v583, %v587
    %v590 = vadd.f32 %v582, %v588
    %v591 = vld [vmem:[#allocation11] sm:$0xf]
    %v592 = vld [vmem:[#allocation11 + $0x4] sm:$0xf]
    %v593 = vld [vmem:[#allocation11 + $0x8] sm:$0xf]
    %v594 = vld [vmem:[#allocation11 + $0xc] sm:$0xf]
    %v595 = vld [vmem:[#allocation11 + $0x10] sm:$0xf]
    %v596 = vld [vmem:[#allocation11 + $0x14] sm:$0xf]
    %v597 = vld [vmem:[#allocation11 + $0x18] sm:$0xf]
    %v598 = vld [vmem:[#allocation11 + $0x1c] sm:$0xf]
    %v599 = vld [vmem:[#allocation11 + $0x20] sm:$0xf]
    %v600 = vld [vmem:[#allocation11 + $0x24] sm:$0xf]
    %v601 = vld [vmem:[#allocation11 + $0x28] sm:$0xf]
    %v602 = vld [vmem:[#allocation11 + $0x2c] sm:$0xf]
    %v603 = vld [vmem:[#allocation11 + $0x30] sm:$0xf]
    %v604 = vld [vmem:[#allocation11 + $0x34] sm:$0xf]
    %v605 = vld [vmem:[#allocation11 + $0x38] sm:$0xf]
    %v606 = vld [vmem:[#allocation11 + $0x3c] sm:$0xf]
    %v607 = vpack.c.bf16 %v590, %v590
    %v608 = vld [vmem:[%s13] sm:$0x1]
    %v610 = vlaneseq
    %v611 = vshrl.u32 %v610, 7
    %v612 = vsub.s32 0, %v611
    %v613 = vrot.slane %v608, %v612
    %v631 = vunpack.c.l.b16 %v591
    %v632 = vunpack.c.l.b16 %v592
    %v633 = vunpack.c.l.b16 %v593
    %v634 = vunpack.c.l.b16 %v594
    %v635 = vunpack.c.l.b16 %v595
    %v636 = vunpack.c.l.b16 %v596
    %v637 = vunpack.c.l.b16 %v597
    %v638 = vunpack.c.l.b16 %v598
    %v639 = vunpack.c.l.b16 %v599
    %v640 = vunpack.c.l.b16 %v600
    %v641 = vunpack.c.l.b16 %v601
    %v642 = vunpack.c.l.b16 %v602
    %v643 = vunpack.c.l.b16 %v603
    %v644 = vunpack.c.l.b16 %v604
    %v645 = vunpack.c.l.b16 %v605
    %v646 = vunpack.c.l.b16 %v606
    %v647 = vpack.c.b16 %v632, %v631
    %v648 = vpack.c.b16 %v634, %v633
    %v649 = vpack.c.b16 %v636, %v635
    %v650 = vpack.c.b16 %v638, %v637
    %v651 = vpack.c.b16 %v640, %v639
    %v652 = vpack.c.b16 %v642, %v641
    %v653 = vpack.c.b16 %v644, %v643
    %v654 = vpack.c.b16 %v646, %v645
    %663 = vmatprep.subr.bf16.mxu0 0
    %664 = vmatpush1.bf16.msra.mxu0 %v647
    %665 = vmatprep.subr.bf16.mxu0 0
    %666 = vmatpush1.bf16.msra.mxu0 %v648
    %667 = vmatprep.subr.bf16.mxu0 0
    %668 = vmatpush1.bf16.msra.mxu0 %v649
    %669 = vmatprep.subr.bf16.mxu0 0
    %670 = vmatpush1.bf16.msra.mxu0 %v650
    %671 = vmatprep.subr.bf16.mxu0 0
    %672 = vmatpush1.bf16.msra.mxu0 %v651
    %673 = vmatprep.subr.bf16.mxu0 0
    %674 = vmatpush1.bf16.msra.mxu0 %v652
    %675 = vmatprep.subr.bf16.mxu0 0
    %676 = vmatpush1.bf16.msra.mxu0 %v653
    %677 = vmatprep.subr.bf16.mxu0 0
    %678 = vmatpush1.bf16.msra.mxu0 %v654
    %679 = vmatprep.subr.bf16.mxu0 0
    %680 = vmatpush1.bf16.msra.mxu0 0
    %681 = vmatprep.subr.bf16.mxu0 0
    %682 = vmatpush1.bf16.msra.mxu0 0
    %683 = vmatprep.subr.bf16.mxu0 0
    %684 = vmatpush1.bf16.msra.mxu0 0
    %685 = vmatprep.subr.bf16.mxu0 0
    %686 = vmatpush1.bf16.msra.mxu0 0
    %687 = vmatprep.subr.bf16.mxu0 0
    %688 = vmatpush1.bf16.msra.mxu0 0
    %689 = vmatprep.subr.bf16.mxu0 0
    %690 = vmatpush1.bf16.msra.mxu0 0
    %691 = vmatprep.subr.bf16.mxu0 0
    %692 = vmatpush1.bf16.msra.mxu0 0
    %693 = vmatprep.subr.bf16.mxu0 0
    %694 = vmatpush1.bf16.msra.mxu0 0
    %695 = vmatprep.mubr.bf16.mxu0 0
    %696 = vmatmul.mubr.bf16.gmra.mrb[0].mxu0 %v607
    %v697 = vpop.f32.mrb[0].mxu0
    %v698 = vadd.f32 %v613, %v697
    %v699 = vpop.f32.mrb[0].mxu0
    %v700 = vpop.f32.mrb[0].mxu0
    %v701 = vpop.f32.mrb[0].mxu0
    %702 = vdwg.mxu0
    %v703 = vmul.f32 %v698, 0.2
    %v704 = vmax.f32 %v698, %v703
    %v705 = vrot.slane %v704, 4
    %v706 = vadd.f32 %v704, %v705
    %v707 = vrot.slane %v706, 2
    %v708 = vadd.f32 %v706, %v707
    %v709 = vrot.slane %v708, 1
    %v710 = vadd.f32 %v708, %v709
    %v711 = vmul.f32 %v710, %v416
    %v712 = vsub.f32 %v704, %v711
    %v713 = vmul.f32 %v712, %v712
    %v714 = vrot.slane %v713, 4
    %v715 = vadd.f32 %v713, %v714
    %v716 = vrot.slane %v715, 2
    %v717 = vadd.f32 %v715, %v716
    %v718 = vrot.slane %v717, 1
    %v719 = vadd.f32 %v717, %v718
    %v720 = vmul.f32 %v719, %v416
    %v721 = vadd.f32 %v720, 1e-05
    %v722 = vrsqrt.pop %v721
    %v723 = vld [vmem:[%s14] sm:$0x1]
    %v724 = vmul.f32 %v722, %v723
    %v725 = vlaneseq
    %v726 = vshrl.u32 %v725, 7
    %v727 = vsub.s32 0, %v726
    %v728 = vrot.slane %v724, %v727
    %v729 = vmul.f32 %v712, %v728
    %v730 = vld [vmem:[%s15] sm:$0x1]
    %v732 = vlaneseq
    %v733 = vshrl.u32 %v732, 7
    %v734 = vsub.s32 0, %v733
    %v735 = vrot.slane %v730, %v734
    %v737 = vadd.f32 %v729, %v735
    %v738 = vld [vmem:[#allocation13] sm:$0xf]
    %v739 = vld [vmem:[#allocation13 + $0x4] sm:$0xf]
    %v740 = vld [vmem:[#allocation13 + $0x8] sm:$0xf]
    %v741 = vld [vmem:[#allocation13 + $0xc] sm:$0xf]
    %v742 = vld [vmem:[#allocation13 + $0x10] sm:$0xf]
    %v743 = vld [vmem:[#allocation13 + $0x14] sm:$0xf]
    %v744 = vld [vmem:[#allocation13 + $0x18] sm:$0xf]
    %v745 = vld [vmem:[#allocation13 + $0x1c] sm:$0xf]
    %v746 = vld [vmem:[#allocation13 + $0x20] sm:$0xf]
    %v747 = vld [vmem:[#allocation13 + $0x24] sm:$0xf]
    %v748 = vld [vmem:[#allocation13 + $0x28] sm:$0xf]
    %v749 = vld [vmem:[#allocation13 + $0x2c] sm:$0xf]
    %v750 = vld [vmem:[#allocation13 + $0x30] sm:$0xf]
    %v751 = vld [vmem:[#allocation13 + $0x34] sm:$0xf]
    %v752 = vld [vmem:[#allocation13 + $0x38] sm:$0xf]
    %v753 = vld [vmem:[#allocation13 + $0x3c] sm:$0xf]
    %v754 = vpack.c.bf16 %v737, %v737
    %v755 = vld [vmem:[%s17] sm:$0x1]
    %v757 = vlaneseq
    %v758 = vshrl.u32 %v757, 7
    %v759 = vsub.s32 0, %v758
    %v760 = vrot.slane %v755, %v759
    %v778 = vunpack.c.l.b16 %v738
    %v779 = vunpack.c.l.b16 %v739
    %v780 = vunpack.c.l.b16 %v740
    %v781 = vunpack.c.l.b16 %v741
    %v782 = vunpack.c.l.b16 %v742
    %v783 = vunpack.c.l.b16 %v743
    %v784 = vunpack.c.l.b16 %v744
    %v785 = vunpack.c.l.b16 %v745
    %v786 = vunpack.c.l.b16 %v746
    %v787 = vunpack.c.l.b16 %v747
    %v788 = vunpack.c.l.b16 %v748
    %v789 = vunpack.c.l.b16 %v749
    %v790 = vunpack.c.l.b16 %v750
    %v791 = vunpack.c.l.b16 %v751
    %v792 = vunpack.c.l.b16 %v752
    %v793 = vunpack.c.l.b16 %v753
    %v794 = vpack.c.b16 %v779, %v778
    %v795 = vpack.c.b16 %v781, %v780
    %v796 = vpack.c.b16 %v783, %v782
    %v797 = vpack.c.b16 %v785, %v784
    %v798 = vpack.c.b16 %v787, %v786
    %v799 = vpack.c.b16 %v789, %v788
    %v800 = vpack.c.b16 %v791, %v790
    %v801 = vpack.c.b16 %v793, %v792
    %810 = vmatprep.subr.bf16.mxu0 0
    %811 = vmatpush1.bf16.msra.mxu0 %v794
    %812 = vmatprep.subr.bf16.mxu0 0
    %813 = vmatpush1.bf16.msra.mxu0 %v795
    %814 = vmatprep.subr.bf16.mxu0 0
    %815 = vmatpush1.bf16.msra.mxu0 %v796
    %816 = vmatprep.subr.bf16.mxu0 0
    %817 = vmatpush1.bf16.msra.mxu0 %v797
    %818 = vmatprep.subr.bf16.mxu0 0
    %819 = vmatpush1.bf16.msra.mxu0 %v798
    %820 = vmatprep.subr.bf16.mxu0 0
    %821 = vmatpush1.bf16.msra.mxu0 %v799
    %822 = vmatprep.subr.bf16.mxu0 0
    %823 = vmatpush1.bf16.msra.mxu0 %v800
    %824 = vmatprep.subr.bf16.mxu0 0
    %825 = vmatpush1.bf16.msra.mxu0 %v801
    %826 = vmatprep.subr.bf16.mxu0 0
    %827 = vmatpush1.bf16.msra.mxu0 0
    %828 = vmatprep.subr.bf16.mxu0 0
    %829 = vmatpush1.bf16.msra.mxu0 0
    %830 = vmatprep.subr.bf16.mxu0 0
    %831 = vmatpush1.bf16.msra.mxu0 0
    %832 = vmatprep.subr.bf16.mxu0 0
    %833 = vmatpush1.bf16.msra.mxu0 0
    %834 = vmatprep.subr.bf16.mxu0 0
    %835 = vmatpush1.bf16.msra.mxu0 0
    %836 = vmatprep.subr.bf16.mxu0 0
    %837 = vmatpush1.bf16.msra.mxu0 0
    %838 = vmatprep.subr.bf16.mxu0 0
    %839 = vmatpush1.bf16.msra.mxu0 0
    %840 = vmatprep.subr.bf16.mxu0 0
    %841 = vmatpush1.bf16.msra.mxu0 0
    %842 = vmatprep.mubr.bf16.mxu0 0
    %843 = vmatmul.mubr.bf16.gmra.mrb[0].mxu0 %v754
    %v844 = vpop.f32.mrb[0].mxu0
    %v845 = vadd.f32 %v760, %v844
    %v846 = vpop.f32.mrb[0].mxu0
    %v847 = vpop.f32.mrb[0].mxu0
    %v848 = vpop.f32.mrb[0].mxu0
    %849 = vdwg.mxu0
    %v850 = vmul.f32 %v845, 0.2
    %v851 = vmax.f32 %v845, %v850
    %852 = vst [vmem:[#allocation14] sm:$0xff] %v851
    // Predicated region
    $region102: #{tpu_custom_call.1} parent=1 // pred_check
      _
    $region103: #{tpu_custom_call.1} parent=1 // pred_check_branch
      %854 = sbr.rel (0) target = $region105
    $region104: #{tpu_custom_call.1} parent=1 // pred_region
      %s856 = ssub.s32 128, 128
      %857 = vsyncadd [#allocation4], %s856
      %s859 = sshll.u32 [#allocation14], 4
      %s860 = int_to_ptr.vmem [resolvable:$true] %s859
      %862 = dma.vmem_to_hbm [thread:$0]  %s860, 128, %s18, [#allocation4]
    $region105: #{tpu_custom_call.1} parent=1 // pred_fallthru
      _
    // Predicated region
    $region106: #{tpu_custom_call.1} parent=1 // pred_check
      _
    $region107: #{tpu_custom_call.1} parent=1 // pred_check_branch
      %864 = sbr.rel (0) target = $region109
    $region108: #{tpu_custom_call.1} parent=1 // pred_region
      %865 = dma.done [#allocation4], 128
    $region109: #{tpu_custom_call.1} parent=1 // pred_fallthru
      _
    %866 = vsyncpa [#allocation3], 1
    %867 = vsyncpa [#allocation6], 1
    %868 = vsyncpa [#allocation9], 1
    %869 = vsyncpa [#allocation12], 1
    %870 = vsyncpa [#allocation4], 1

</llo_original>
